<compile_context>
chip_gen: v7x
topology: tpu7x:2x2x1
jax: 0.10.0
libtpu: 0.0.40
codegen_flags: <defaults>
</compile_context>

<pallas_src>
import jax
import jax.numpy as jnp
from jax.experimental import pallas as pl
from jax.experimental.pallas import tpu as pltpu


def _disc_kernel(x_ref, w_ref, b_ref, o_ref):
    # x_ref: (TM, D)  VMEM batch tile            (D = 50 * in_features)
    # w_ref: (D, 128) VMEM fused weight column, broadcast across all 128 lanes
    # b_ref: (1, 1)   SMEM fused bias scalar
    # o_ref: (1, TM)  VMEM lane-dense output row (batch mapped to lanes)
    #
    # Canonical MXU matmul (contraction over x's minor dim / w's major dim):
    # no transpose of the big x tile is ever required.  Every column of y holds
    # the same GEMV result because w is lane-broadcast.
    y = jnp.dot(x_ref[...], w_ref[...], preferred_element_type=jnp.float32)  # (TM, 128)
    # Relayout only the small result so the batch dim lands on lanes
    # (lane-dense, unmasked output stores); hidden under the x-tile DMA.
    row = jnp.transpose(y, (1, 0))[0:1, :]                                   # (1, TM)
    o_ref[...] = jax.nn.sigmoid(row + b_ref[0, 0])


def _round_up(v, m):
    return ((v + m - 1) // m) * m


def discriminator_forward(x, params, *, tm=4096):
    """x: [B, 50, in_features] float32 -> [B, 1] float32."""
    w1, b1, w2, b2 = params
    B = x.shape[0]
    x_flat = x.reshape(B, -1)                    # torch row-major flatten
    D = x_flat.shape[1]

    # Fuse Linear(50F, 3) and Linear(3, 1): no nonlinearity between them.
    w_eff = (w1 @ w2).astype(jnp.float32)                      # (D, 1)
    w_bcast = jnp.broadcast_to(w_eff, (D, 128))                # lane-broadcast column
    b_eff = (b1 @ w2 + b2).reshape(1, 1).astype(jnp.float32)   # scalar, via SMEM

    # Batch tile selection:
    #  * multiple of 128 -> the lane-dense (1, TM) output block stays unmasked
    #  * capped at `tm` (4096 -> ~8 MiB of x per VMEM buffer incl. lane padding)
    #  * >= 2 grid steps for moderate/large B so both v7x TensorCores run
    tm_eff = min(tm, _round_up(pl.cdiv(B, 2), 128))
    grid_m = pl.cdiv(B, tm_eff)
    b_out = grid_m * tm_eff

    # No jnp.pad of x: the boundary block is clipped by Pallas; garbage tail
    # lanes of the output row are discarded by the [:, :B] slice below.
    if grid_m > 1:
        # Deeper buffering hides v7x's short per-step DMA behind compute/overhead.
        x_spec = pl.BlockSpec((tm_eff, D), lambda i: (i, 0),
                              pipeline_mode=pl.Buffered(3))
    else:
        x_spec = pl.BlockSpec((tm_eff, D), lambda i: (i, 0))

    out_row = pl.pallas_call(
        _disc_kernel,
        out_shape=jax.ShapeDtypeStruct((1, b_out), jnp.float32),
        grid=(grid_m,),
        in_specs=[
            x_spec,                                                  # x batch tile
            pl.BlockSpec((D, 128), lambda i: (0, 0)),                # fused weight (resident)
            pl.BlockSpec(memory_space=pltpu.MemorySpace.SMEM),       # fused bias scalar
        ],
        out_specs=pl.BlockSpec((1, tm_eff), lambda i: (0, i)),       # lane-dense output row
        compiler_params=pltpu.CompilerParams(
            dimension_semantics=("parallel",),
            vmem_limit_bytes=32 << 20),                              # v5e default is 16 MiB
        cost_estimate=pl.CostEstimate(
            flops=2 * b_out * D,
            transcendentals=b_out,
            bytes_accessed=b_out * D * 4 + D * 128 * 4 + b_out * 4),
    )(x_flat, w_bcast, b_eff)

    return out_row[0, :B].reshape(B, 1)


def init_discriminator_params(key, in_features):
    """Deterministic init matching nn.Linear default (uniform ±1/sqrt(fan_in))."""
    f1 = 50 * in_features
    k1, k2, k3, k4 = jax.random.split(key, 4)
    lim1 = 1.0 / jnp.sqrt(jnp.float32(f1))
    lim2 = 1.0 / jnp.sqrt(jnp.float32(3))
    # Stored pre-transposed: w1 is (50*F, 3), w2 is (3, 1); biases kept 2D.
    w1 = jax.random.uniform(k1, (f1, 3), jnp.float32, -lim1, lim1)
    b1 = jax.random.uniform(k2, (1, 3), jnp.float32, -lim1, lim1)
    w2 = jax.random.uniform(k3, (3, 1), jnp.float32, -lim2, lim2)
    b2 = jax.random.uniform(k4, (1, 1), jnp.float32, -lim2, lim2)
    return w1, b1, w2, b2


if __name__ == "__main__":
    in_features = 8
    batch_size = 2

    key = jax.random.PRNGKey(0)
    k_x, k_p = jax.random.split(key)

    x = jax.random.normal(k_x, (batch_size, 50, in_features), dtype=jnp.float32)
    params = init_discriminator_params(k_p, in_features)

    disc = jax.jit(discriminator_forward)
    out = jax.block_until_ready(disc(x, params))

    # Reference: unfused two-layer form in plain JAX (matches PyTorch module).
    w1, b1, w2, b2 = params
    ref = jax.nn.sigmoid((x.reshape(batch_size, -1) @ w1 + b1) @ w2 + b2)
    assert out.shape == (batch_size, 1)
    assert jnp.allclose(out, ref, atol=1e-5, rtol=1e-5), (out, ref)

    print("KERNEL_OK")
</pallas_src>

<mosaic_0001>
module attributes {stable_mosaic.version = 11 : i64} {
  func.func @_disc_kernel(%arg0: i32, %arg1: memref<128x400xf32, #tpu.memory_space<vmem>>, %arg2: memref<400x128xf32, #tpu.memory_space<vmem>>, %arg3: memref<1x1xf32, #tpu.memory_space<smem>>, %arg4: memref<1x128xf32, #tpu.memory_space<vmem>>) attributes {dimension_semantics = [#tpu.dimension_semantics<parallel>], iteration_bounds = array<i64: 1>, scalar_prefetch = 0 : i64, scratch_operands = 0 : i64, tpu.core_type = #tpu.core_type<tc>, window_params = [{transform_indices = @transform_0, window_bounds = array<i64: 128, 400>}, {pipeline_mode = #tpu.pipeline_mode<synchronous>, transform_indices = @transform_1, window_bounds = array<i64: 400, 128>}, {transform_indices = @transform_2, window_bounds = array<i64: 1, 1>}, {transform_indices = @transform_3, window_bounds = array<i64: 1, 128>}]} {
    %c0 = arith.constant 0 : index
    %c0_0 = arith.constant 0 : index
    %0 = vector.load %arg1[%c0, %c0_0] : memref<128x400xf32, #tpu.memory_space<vmem>>, vector<128x400xf32>
    %c0_1 = arith.constant 0 : index
    %c0_2 = arith.constant 0 : index
    %1 = vector.load %arg2[%c0_1, %c0_2] : memref<400x128xf32, #tpu.memory_space<vmem>>, vector<400x128xf32>
    %cst = arith.constant dense<0.000000e+00> : vector<128x128xf32>
    %2 = tpu.matmul %0, %1, %cst {dimension_numbers = #tpu.dot_dimension_numbers<[1], [0], [0], [1], [0, 0, 1, 1], [], []>} : vector<128x400xf32>, vector<400x128xf32>, vector<128x128xf32> -> vector<128x128xf32>
    %3 = tpu.transpose %2, [1, 0] : vector<128x128xf32> -> vector<128x128xf32>
    %4 = vector.extract_strided_slice %3 {offsets = [0, 0], sizes = [1, 128], strides = [1, 1]} : vector<128x128xf32> to vector<1x128xf32>
    %c0_3 = arith.constant 0 : index
    %c0_4 = arith.constant 0 : index
    %5 = memref.load %arg3[%c0_3, %c0_4] : memref<1x1xf32, #tpu.memory_space<smem>>
    %6 = vector.broadcast %5 : f32 to vector<1x128xf32>
    %7 = arith.addf %4, %6 : vector<1x128xf32>
    %8 = arith.negf %7 : vector<1x128xf32>
    %9 = math.exp %8 : vector<1x128xf32>
    %cst_5 = arith.constant 1.000000e+00 : f32
    %10 = vector.broadcast %cst_5 : f32 to vector<1x128xf32>
    %11 = arith.addf %10, %9 : vector<1x128xf32>
    %12 = arith.divf %10, %11 : vector<1x128xf32>
    %c0_6 = arith.constant 0 : index
    %c0_7 = arith.constant 0 : index
    %13 = vector.load %arg4[%c0_6, %c0_7] : memref<1x128xf32, #tpu.memory_space<vmem>>, vector<1x128xf32>
    tpu.vector_store %arg4[%c0_6, %c0_7], %12 {strides = array<i32>} : memref<1x128xf32, #tpu.memory_space<vmem>>, vector<1x128xf32>,
    return
  }
  func.func @transform_0(%arg0: i32) -> (i32, i32) {
    %c0_i32 = arith.constant 0 : i32
    %c0_i32_0 = arith.constant 0 : i32
    return %arg0, %c0_i32 : i32, i32
  }
  func.func @transform_1(%arg0: i32) -> (i32, i32) {
    %c0_i32 = arith.constant 0 : i32
    %c0_i32_0 = arith.constant 0 : i32
    %c0_i32_1 = arith.constant 0 : i32
    return %c0_i32, %c0_i32_0 : i32, i32
  }
  func.func @transform_2(%arg0: i32) -> (i32, i32) {
    %c0_i32 = arith.constant 0 : i32
    %c0_i32_0 = arith.constant 0 : i32
    %c0_i32_1 = arith.constant 0 : i32
    return %c0_i32, %c0_i32_0 : i32, i32
  }
  func.func @transform_3(%arg0: i32) -> (i32, i32) {
    %c0_i32 = arith.constant 0 : i32
    %c0_i32_0 = arith.constant 0 : i32
    return %c0_i32, %arg0 : i32, i32
  }
}

</mosaic_0001>

<llo_original>
// kernel: discriminator_forward.1
$region0: #{discriminator_forward.1}
  #allocation0 [shape = 'u32[]', space=smem, size = 0x4, offset = 0x4, fixed_abs, tag = 'smem constant byte address 0x4 - core index']
  #allocation1 [shape = 'u32[144,128]{1,0:T(1,128)}', space=vmem, size = 0x12000, scoped, tag = 'internal scratch']
  #allocation2 [shape = 'f32[1,1]{1,0:T(1,128)S(6)}', space=smem, size = 0x200, scoped, tag = 'scoped memory for discriminator_forward.1']
  %s0 = inlined_call_operand.vmem [shape: f32[2,400], index: 0, kind: input, shape index: {}]
  %s1 = inlined_call_operand.vmem [shape: f32[400,128], index: 1, kind: input, shape index: {}]
  %s2 = inlined_call_operand.<no memory space> [shape: f32[1,1], index: 2, kind: input, shape index: {}]
  %s3 = inlined_call_operand.vmem [shape: f32[1,128], index: 3, kind: output, shape index: {}]
  %s4 = sld [smem:[#allocation0]]
  $region22: #{discriminator_forward.1} parent=0
    _
  %s6 = ssub.s32 1, %s4
  %s7 = scalar_select 0, %s6, %s4
  %8 = sst [smem:[#allocation2]] %s2
  // Predicated region
  $region2: #{discriminator_forward.1} parent=0 // pred_check
    _
  $region3: #{discriminator_forward.1} parent=0 // pred_check_branch
    %10 = sbr.rel (0) target = $region5
  $region4: #{discriminator_forward.1} parent=0 // pred_region
    _
  $region5: #{discriminator_forward.1} parent=0 // pred_fallthru
    _
  // Predicated region
  $region6: #{discriminator_forward.1} parent=0 // pred_check
    _
  $region7: #{discriminator_forward.1} parent=0 // pred_check_branch
    %12 = sbr.rel (0) target = $region9
  $region8: #{discriminator_forward.1} parent=0 // pred_region
    _
  $region9: #{discriminator_forward.1} parent=0 // pred_fallthru
    _
  // Predicated region
  $region10: #{discriminator_forward.1} parent=0 // pred_check
    _
  $region11: #{discriminator_forward.1} parent=0 // pred_check_branch
    %14 = sbr.rel (0) target = $region13
  $region12: #{discriminator_forward.1} parent=0 // pred_region
    _
  $region13: #{discriminator_forward.1} parent=0 // pred_fallthru
    _
  %v15 = vld [vmem:[%s0] sm:$0xff]
  %v16 = vld [vmem:[%s0 + $0x8] sm:$0xff]
  %v17 = vld [vmem:[%s0 + $0x10] sm:$0xff]
  %v18 = vld [vmem:[%s0 + $0x18] sm:$0xff]
  %v19 = vld [vmem:[%s0 + $0x20] sm:$0xff]
  %v20 = vld [vmem:[%s0 + $0x28] sm:$0xff]
  %v21 = vld [vmem:[%s0 + $0x30] sm:$0xff]
  %v22 = vld [vmem:[%s0 + $0x38] sm:$0xff]
  %v23 = vld [vmem:[%s0 + $0x40] sm:$0xff]
  %v24 = vld [vmem:[%s0 + $0x48] sm:$0xff]
  %v25 = vld [vmem:[%s0 + $0x50] sm:$0xff]
  %v26 = vld [vmem:[%s0 + $0x58] sm:$0xff]
  %v27 = vld [vmem:[%s0 + $0x60] sm:$0xff]
  %v28 = vld [vmem:[%s0 + $0x68] sm:$0xff]
  %v29 = vld [vmem:[%s0 + $0x70] sm:$0xff]
  %v30 = vld [vmem:[%s0 + $0x78] sm:$0xff]
  %v31 = vld [vmem:[%s0 + $0x80] sm:$0xff]
  %v32 = vld [vmem:[%s0 + $0x88] sm:$0xff]
  %v33 = vld [vmem:[%s0 + $0x90] sm:$0xff]
  %v34 = vld [vmem:[%s0 + $0x98] sm:$0xff]
  %v35 = vld [vmem:[%s0 + $0xa0] sm:$0xff]
  %v36 = vld [vmem:[%s0 + $0xa8] sm:$0xff]
  %v37 = vld [vmem:[%s0 + $0xb0] sm:$0xff]
  %v38 = vld [vmem:[%s0 + $0xb8] sm:$0xff]
  %v39 = vld [vmem:[%s0 + $0xc0] sm:$0xff]
  %v40 = vld [vmem:[%s0 + $0xc8] sm:$0xff]
  %v41 = vld [vmem:[%s0 + $0xd0] sm:$0xff]
  %v42 = vld [vmem:[%s0 + $0xd8] sm:$0xff]
  %v43 = vld [vmem:[%s0 + $0xe0] sm:$0xff]
  %v44 = vld [vmem:[%s0 + $0xe8] sm:$0xff]
  %v45 = vld [vmem:[%s0 + $0xf0] sm:$0xff]
  %v46 = vld [vmem:[%s0 + $0xf8] sm:$0xff]
  %v47 = vld [vmem:[%s0 + $0x100] sm:$0xff]
  %v48 = vld [vmem:[%s0 + $0x108] sm:$0xff]
  %v49 = vld [vmem:[%s0 + $0x110] sm:$0xff]
  %v50 = vld [vmem:[%s0 + $0x118] sm:$0xff]
  %v51 = vld [vmem:[%s0 + $0x120] sm:$0xff]
  %v52 = vld [vmem:[%s0 + $0x128] sm:$0xff]
  %v53 = vld [vmem:[%s0 + $0x130] sm:$0xff]
  %v54 = vld [vmem:[%s0 + $0x138] sm:$0xff]
  %v55 = vld [vmem:[%s0 + $0x140] sm:$0xff]
  %v56 = vld [vmem:[%s0 + $0x148] sm:$0xff]
  %v57 = vld [vmem:[%s0 + $0x150] sm:$0xff]
  %v58 = vld [vmem:[%s0 + $0x158] sm:$0xff]
  %v59 = vld [vmem:[%s0 + $0x160] sm:$0xff]
  %v60 = vld [vmem:[%s0 + $0x168] sm:$0xff]
  %v61 = vld [vmem:[%s0 + $0x170] sm:$0xff]
  %v62 = vld [vmem:[%s0 + $0x178] sm:$0xff]
  %v63 = vld [vmem:[%s0 + $0x180] sm:$0xff]
  %v64 = vld [vmem:[%s0 + $0x188] sm:$0xff]
  %v65 = vld [vmem:[%s0 + $0x190] sm:$0xff]
  %v66 = vld [vmem:[%s0 + $0x198] sm:$0xff]
  %v67 = vld [vmem:[%s0 + $0x1a0] sm:$0xff]
  %v68 = vld [vmem:[%s0 + $0x1a8] sm:$0xff]
  %v69 = vld [vmem:[%s0 + $0x1b0] sm:$0xff]
  %v70 = vld [vmem:[%s0 + $0x1b8] sm:$0xff]
  %v71 = vld [vmem:[%s0 + $0x1c0] sm:$0xff]
  %v72 = vld [vmem:[%s0 + $0x1c8] sm:$0xff]
  %v73 = vld [vmem:[%s0 + $0x1d0] sm:$0xff]
  %v74 = vld [vmem:[%s0 + $0x1d8] sm:$0xff]
  %v75 = vld [vmem:[%s0 + $0x1e0] sm:$0xff]
  %v76 = vld [vmem:[%s0 + $0x1e8] sm:$0xff]
  %v77 = vld [vmem:[%s0 + $0x1f0] sm:$0xff]
  %v78 = vld [vmem:[%s0 + $0x1f8] sm:$0xff]
  %v79 = vld [vmem:[%s1] sm:$0xff]
  %v80 = vld [vmem:[%s1 + $0x8] sm:$0xff]
  %v81 = vld [vmem:[%s1 + $0x10] sm:$0xff]
  %v82 = vld [vmem:[%s1 + $0x18] sm:$0xff]
  %v83 = vld [vmem:[%s1 + $0x20] sm:$0xff]
  %v84 = vld [vmem:[%s1 + $0x28] sm:$0xff]
  %v85 = vld [vmem:[%s1 + $0x30] sm:$0xff]
  %v86 = vld [vmem:[%s1 + $0x38] sm:$0xff]
  %v87 = vld [vmem:[%s1 + $0x40] sm:$0xff]
  %v88 = vld [vmem:[%s1 + $0x48] sm:$0xff]
  %v89 = vld [vmem:[%s1 + $0x50] sm:$0xff]
  %v90 = vld [vmem:[%s1 + $0x58] sm:$0xff]
  %v91 = vld [vmem:[%s1 + $0x60] sm:$0xff]
  %v92 = vld [vmem:[%s1 + $0x68] sm:$0xff]
  %v93 = vld [vmem:[%s1 + $0x70] sm:$0xff]
  %v94 = vld [vmem:[%s1 + $0x78] sm:$0xff]
  %v95 = vld [vmem:[%s1 + $0x80] sm:$0xff]
  %v96 = vld [vmem:[%s1 + $0x88] sm:$0xff]
  %v97 = vld [vmem:[%s1 + $0x90] sm:$0xff]
  %v98 = vld [vmem:[%s1 + $0x98] sm:$0xff]
  %v99 = vld [vmem:[%s1 + $0xa0] sm:$0xff]
  %v100 = vld [vmem:[%s1 + $0xa8] sm:$0xff]
  %v101 = vld [vmem:[%s1 + $0xb0] sm:$0xff]
  %v102 = vld [vmem:[%s1 + $0xb8] sm:$0xff]
  %v103 = vld [vmem:[%s1 + $0xc0] sm:$0xff]
  %v104 = vld [vmem:[%s1 + $0xc8] sm:$0xff]
  %v105 = vld [vmem:[%s1 + $0xd0] sm:$0xff]
  %v106 = vld [vmem:[%s1 + $0xd8] sm:$0xff]
  %v107 = vld [vmem:[%s1 + $0xe0] sm:$0xff]
  %v108 = vld [vmem:[%s1 + $0xe8] sm:$0xff]
  %v109 = vld [vmem:[%s1 + $0xf0] sm:$0xff]
  %v110 = vld [vmem:[%s1 + $0xf8] sm:$0xff]
  %v111 = vld [vmem:[%s1 + $0x100] sm:$0xff]
  %v112 = vld [vmem:[%s1 + $0x108] sm:$0xff]
  %v113 = vld [vmem:[%s1 + $0x110] sm:$0xff]
  %v114 = vld [vmem:[%s1 + $0x118] sm:$0xff]
  %v115 = vld [vmem:[%s1 + $0x120] sm:$0xff]
  %v116 = vld [vmem:[%s1 + $0x128] sm:$0xff]
  %v117 = vld [vmem:[%s1 + $0x130] sm:$0xff]
  %v118 = vld [vmem:[%s1 + $0x138] sm:$0xff]
  %v119 = vld [vmem:[%s1 + $0x140] sm:$0xff]
  %v120 = vld [vmem:[%s1 + $0x148] sm:$0xff]
  %v121 = vld [vmem:[%s1 + $0x150] sm:$0xff]
  %v122 = vld [vmem:[%s1 + $0x158] sm:$0xff]
  %v123 = vld [vmem:[%s1 + $0x160] sm:$0xff]
  %v124 = vld [vmem:[%s1 + $0x168] sm:$0xff]
  %v125 = vld [vmem:[%s1 + $0x170] sm:$0xff]
  %v126 = vld [vmem:[%s1 + $0x178] sm:$0xff]
  %v127 = vld [vmem:[%s1 + $0x180] sm:$0xff]
  %v128 = vld [vmem:[%s1 + $0x188] sm:$0xff]
  %v193 = vcombine.low %v15, %v16
  %v194 = vcombine.high %v15, %v16
  %v195 = vcombine.low %v17, %v18
  %v196 = vcombine.high %v17, %v18
  %v198 = vunpack.c.l.s4 1983009808
  %v199 = vunpack.c.0.s8 %v198
  %v200 = vlaneseq
  %v201 = vshrl.u32 %v200, 7
  %v202 = vsub.s32 %v199, %v201
  %v203 = vrot.slane %v193, %v202
  %v205 = vunpack.c.l.s4 1983009808
  %v206 = vunpack.c.0.s8 %v205
  %v207 = vlaneseq
  %v208 = vshrl.u32 %v207, 7
  %v209 = vsub.s32 %v206, %v208
  %v210 = vrot.slane %v194, %v209
  %v212 = vunpack.c.l.s4 1983009808
  %v213 = vunpack.c.0.s8 %v212
  %v214 = vlaneseq
  %v215 = vshrl.u32 %v214, 7
  %v216 = vsub.s32 %v213, %v215
  %v217 = vrot.slane %v195, %v216
  %v219 = vunpack.c.l.s4 1983009808
  %v220 = vunpack.c.0.s8 %v219
  %v221 = vlaneseq
  %v222 = vshrl.u32 %v221, 7
  %v223 = vsub.s32 %v220, %v222
  %v224 = vrot.slane %v196, %v223
  %v225 = vcombine.low %v203, %v217
  %v226 = vcombine.high %v203, %v217
  %v227 = vcombine.low %v210, %v224
  %v228 = vcombine.high %v210, %v224
  %v229 = vcombine.low %v19, %v20
  %v230 = vcombine.high %v19, %v20
  %v231 = vcombine.low %v21, %v22
  %v232 = vcombine.high %v21, %v22
  %v234 = vunpack.c.l.s4 1983009808
  %v235 = vunpack.c.0.s8 %v234
  %v236 = vlaneseq
  %v237 = vshrl.u32 %v236, 7
  %v238 = vsub.s32 %v235, %v237
  %v239 = vrot.slane %v229, %v238
  %v241 = vunpack.c.l.s4 1983009808
  %v242 = vunpack.c.0.s8 %v241
  %v243 = vlaneseq
  %v244 = vshrl.u32 %v243, 7
  %v245 = vsub.s32 %v242, %v244
  %v246 = vrot.slane %v230, %v245
  %v248 = vunpack.c.l.s4 1983009808
  %v249 = vunpack.c.0.s8 %v248
  %v250 = vlaneseq
  %v251 = vshrl.u32 %v250, 7
  %v252 = vsub.s32 %v249, %v251
  %v253 = vrot.slane %v231, %v252
  %v255 = vunpack.c.l.s4 1983009808
  %v256 = vunpack.c.0.s8 %v255
  %v257 = vlaneseq
  %v258 = vshrl.u32 %v257, 7
  %v259 = vsub.s32 %v256, %v258
  %v260 = vrot.slane %v232, %v259
  %v261 = vcombine.low %v239, %v253
  %v262 = vcombine.high %v239, %v253
  %v263 = vcombine.low %v246, %v260
  %v264 = vcombine.high %v246, %v260
  %v265 = vcombine.low %v23, %v24
  %v266 = vcombine.high %v23, %v24
  %v267 = vcombine.low %v25, %v26
  %v268 = vcombine.high %v25, %v26
  %v270 = vunpack.c.l.s4 1983009808
  %v271 = vunpack.c.0.s8 %v270
  %v272 = vlaneseq
  %v273 = vshrl.u32 %v272, 7
  %v274 = vsub.s32 %v271, %v273
  %v275 = vrot.slane %v265, %v274
  %v277 = vunpack.c.l.s4 1983009808
  %v278 = vunpack.c.0.s8 %v277
  %v279 = vlaneseq
  %v280 = vshrl.u32 %v279, 7
  %v281 = vsub.s32 %v278, %v280
  %v282 = vrot.slane %v266, %v281
  %v284 = vunpack.c.l.s4 1983009808
  %v285 = vunpack.c.0.s8 %v284
  %v286 = vlaneseq
  %v287 = vshrl.u32 %v286, 7
  %v288 = vsub.s32 %v285, %v287
  %v289 = vrot.slane %v267, %v288
  %v291 = vunpack.c.l.s4 1983009808
  %v292 = vunpack.c.0.s8 %v291
  %v293 = vlaneseq
  %v294 = vshrl.u32 %v293, 7
  %v295 = vsub.s32 %v292, %v294
  %v296 = vrot.slane %v268, %v295
  %v297 = vcombine.low %v275, %v289
  %v298 = vcombine.high %v275, %v289
  %v299 = vcombine.low %v282, %v296
  %v300 = vcombine.high %v282, %v296
  %v301 = vcombine.low %v27, %v28
  %v302 = vcombine.high %v27, %v28
  %v303 = vcombine.low %v29, %v30
  %v304 = vcombine.high %v29, %v30
  %v306 = vunpack.c.l.s4 1983009808
  %v307 = vunpack.c.0.s8 %v306
  %v308 = vlaneseq
  %v309 = vshrl.u32 %v308, 7
  %v310 = vsub.s32 %v307, %v309
  %v311 = vrot.slane %v301, %v310
  %v313 = vunpack.c.l.s4 1983009808
  %v314 = vunpack.c.0.s8 %v313
  %v315 = vlaneseq
  %v316 = vshrl.u32 %v315, 7
  %v317 = vsub.s32 %v314, %v316
  %v318 = vrot.slane %v302, %v317
  %v320 = vunpack.c.l.s4 1983009808
  %v321 = vunpack.c.0.s8 %v320
  %v322 = vlaneseq
  %v323 = vshrl.u32 %v322, 7
  %v324 = vsub.s32 %v321, %v323
  %v325 = vrot.slane %v303, %v324
  %v327 = vunpack.c.l.s4 1983009808
  %v328 = vunpack.c.0.s8 %v327
  %v329 = vlaneseq
  %v330 = vshrl.u32 %v329, 7
  %v331 = vsub.s32 %v328, %v330
  %v332 = vrot.slane %v304, %v331
  %v333 = vcombine.low %v311, %v325
  %v334 = vcombine.high %v311, %v325
  %v335 = vcombine.low %v318, %v332
  %v336 = vcombine.high %v318, %v332
  %v337 = vcombine.low %v31, %v32
  %v338 = vcombine.high %v31, %v32
  %v339 = vcombine.low %v33, %v34
  %v340 = vcombine.high %v33, %v34
  %v342 = vunpack.c.l.s4 1983009808
  %v343 = vunpack.c.0.s8 %v342
  %v344 = vlaneseq
  %v345 = vshrl.u32 %v344, 7
  %v346 = vsub.s32 %v343, %v345
  %v347 = vrot.slane %v337, %v346
  %v349 = vunpack.c.l.s4 1983009808
  %v350 = vunpack.c.0.s8 %v349
  %v351 = vlaneseq
  %v352 = vshrl.u32 %v351, 7
  %v353 = vsub.s32 %v350, %v352
  %v354 = vrot.slane %v338, %v353
  %v356 = vunpack.c.l.s4 1983009808
  %v357 = vunpack.c.0.s8 %v356
  %v358 = vlaneseq
  %v359 = vshrl.u32 %v358, 7
  %v360 = vsub.s32 %v357, %v359
  %v361 = vrot.slane %v339, %v360
  %v363 = vunpack.c.l.s4 1983009808
  %v364 = vunpack.c.0.s8 %v363
  %v365 = vlaneseq
  %v366 = vshrl.u32 %v365, 7
  %v367 = vsub.s32 %v364, %v366
  %v368 = vrot.slane %v340, %v367
  %v369 = vcombine.low %v347, %v361
  %v370 = vcombine.high %v347, %v361
  %v371 = vcombine.low %v354, %v368
  %v372 = vcombine.high %v354, %v368
  %v373 = vcombine.low %v35, %v36
  %v374 = vcombine.high %v35, %v36
  %v375 = vcombine.low %v37, %v38
  %v376 = vcombine.high %v37, %v38
  %v378 = vunpack.c.l.s4 1983009808
  %v379 = vunpack.c.0.s8 %v378
  %v380 = vlaneseq
  %v381 = vshrl.u32 %v380, 7
  %v382 = vsub.s32 %v379, %v381
  %v383 = vrot.slane %v373, %v382
  %v385 = vunpack.c.l.s4 1983009808
  %v386 = vunpack.c.0.s8 %v385
  %v387 = vlaneseq
  %v388 = vshrl.u32 %v387, 7
  %v389 = vsub.s32 %v386, %v388
  %v390 = vrot.slane %v374, %v389
  %v392 = vunpack.c.l.s4 1983009808
  %v393 = vunpack.c.0.s8 %v392
  %v394 = vlaneseq
  %v395 = vshrl.u32 %v394, 7
  %v396 = vsub.s32 %v393, %v395
  %v397 = vrot.slane %v375, %v396
  %v399 = vunpack.c.l.s4 1983009808
  %v400 = vunpack.c.0.s8 %v399
  %v401 = vlaneseq
  %v402 = vshrl.u32 %v401, 7
  %v403 = vsub.s32 %v400, %v402
  %v404 = vrot.slane %v376, %v403
  %v405 = vcombine.low %v383, %v397
  %v406 = vcombine.high %v383, %v397
  %v407 = vcombine.low %v390, %v404
  %v408 = vcombine.high %v390, %v404
  %v409 = vcombine.low %v39, %v40
  %v410 = vcombine.high %v39, %v40
  %v411 = vcombine.low %v41, %v42
  %v412 = vcombine.high %v41, %v42
  %v414 = vunpack.c.l.s4 1983009808
  %v415 = vunpack.c.0.s8 %v414
  %v416 = vlaneseq
  %v417 = vshrl.u32 %v416, 7
  %v418 = vsub.s32 %v415, %v417
  %v419 = vrot.slane %v409, %v418
  %v421 = vunpack.c.l.s4 1983009808
  %v422 = vunpack.c.0.s8 %v421
  %v423 = vlaneseq
  %v424 = vshrl.u32 %v423, 7
  %v425 = vsub.s32 %v422, %v424
  %v426 = vrot.slane %v410, %v425
  %v428 = vunpack.c.l.s4 1983009808
  %v429 = vunpack.c.0.s8 %v428
  %v430 = vlaneseq
  %v431 = vshrl.u32 %v430, 7
  %v432 = vsub.s32 %v429, %v431
  %v433 = vrot.slane %v411, %v432
  %v435 = vunpack.c.l.s4 1983009808
  %v436 = vunpack.c.0.s8 %v435
  %v437 = vlaneseq
  %v438 = vshrl.u32 %v437, 7
  %v439 = vsub.s32 %v436, %v438
  %v440 = vrot.slane %v412, %v439
  %v441 = vcombine.low %v419, %v433
  %v442 = vcombine.high %v419, %v433
  %v443 = vcombine.low %v426, %v440
  %v444 = vcombine.high %v426, %v440
  %v445 = vcombine.low %v43, %v44
  %v446 = vcombine.high %v43, %v44
  %v447 = vcombine.low %v45, %v46
  %v448 = vcombine.high %v45, %v46
  %v450 = vunpack.c.l.s4 1983009808
  %v451 = vunpack.c.0.s8 %v450
  %v452 = vlaneseq
  %v453 = vshrl.u32 %v452, 7
  %v454 = vsub.s32 %v451, %v453
  %v455 = vrot.slane %v445, %v454
  %v457 = vunpack.c.l.s4 1983009808
  %v458 = vunpack.c.0.s8 %v457
  %v459 = vlaneseq
  %v460 = vshrl.u32 %v459, 7
  %v461 = vsub.s32 %v458, %v460
  %v462 = vrot.slane %v446, %v461
  %v464 = vunpack.c.l.s4 1983009808
  %v465 = vunpack.c.0.s8 %v464
  %v466 = vlaneseq
  %v467 = vshrl.u32 %v466, 7
  %v468 = vsub.s32 %v465, %v467
  %v469 = vrot.slane %v447, %v468
  %v471 = vunpack.c.l.s4 1983009808
  %v472 = vunpack.c.0.s8 %v471
  %v473 = vlaneseq
  %v474 = vshrl.u32 %v473, 7
  %v475 = vsub.s32 %v472, %v474
  %v476 = vrot.slane %v448, %v475
  %v477 = vcombine.low %v455, %v469
  %v478 = vcombine.high %v455, %v469
  %v479 = vcombine.low %v462, %v476
  %v480 = vcombine.high %v462, %v476
  %v481 = vcombine.low %v47, %v48
  %v482 = vcombine.high %v47, %v48
  %v483 = vcombine.low %v49, %v50
  %v484 = vcombine.high %v49, %v50
  %v486 = vunpack.c.l.s4 1983009808
  %v487 = vunpack.c.0.s8 %v486
  %v488 = vlaneseq
  %v489 = vshrl.u32 %v488, 7
  %v490 = vsub.s32 %v487, %v489
  %v491 = vrot.slane %v481, %v490
  %v493 = vunpack.c.l.s4 1983009808
  %v494 = vunpack.c.0.s8 %v493
  %v495 = vlaneseq
  %v496 = vshrl.u32 %v495, 7
  %v497 = vsub.s32 %v494, %v496
  %v498 = vrot.slane %v482, %v497
  %v500 = vunpack.c.l.s4 1983009808
  %v501 = vunpack.c.0.s8 %v500
  %v502 = vlaneseq
  %v503 = vshrl.u32 %v502, 7
  %v504 = vsub.s32 %v501, %v503
  %v505 = vrot.slane %v483, %v504
  %v507 = vunpack.c.l.s4 1983009808
  %v508 = vunpack.c.0.s8 %v507
  %v509 = vlaneseq
  %v510 = vshrl.u32 %v509, 7
  %v511 = vsub.s32 %v508, %v510
  %v512 = vrot.slane %v484, %v511
  %v513 = vcombine.low %v491, %v505
  %v514 = vcombine.high %v491, %v505
  %v515 = vcombine.low %v498, %v512
  %v516 = vcombine.high %v498, %v512
  %v517 = vcombine.low %v51, %v52
  %v518 = vcombine.high %v51, %v52
  %v519 = vcombine.low %v53, %v54
  %v520 = vcombine.high %v53, %v54
  %v522 = vunpack.c.l.s4 1983009808
  %v523 = vunpack.c.0.s8 %v522
  %v524 = vlaneseq
  %v525 = vshrl.u32 %v524, 7
  %v526 = vsub.s32 %v523, %v525
  %v527 = vrot.slane %v517, %v526
  %v529 = vunpack.c.l.s4 1983009808
  %v530 = vunpack.c.0.s8 %v529
  %v531 = vlaneseq
  %v532 = vshrl.u32 %v531, 7
  %v533 = vsub.s32 %v530, %v532
  %v534 = vrot.slane %v518, %v533
  %v536 = vunpack.c.l.s4 1983009808
  %v537 = vunpack.c.0.s8 %v536
  %v538 = vlaneseq
  %v539 = vshrl.u32 %v538, 7
  %v540 = vsub.s32 %v537, %v539
  %v541 = vrot.slane %v519, %v540
  %v543 = vunpack.c.l.s4 1983009808
  %v544 = vunpack.c.0.s8 %v543
  %v545 = vlaneseq
  %v546 = vshrl.u32 %v545, 7
  %v547 = vsub.s32 %v544, %v546
  %v548 = vrot.slane %v520, %v547
  %v549 = vcombine.low %v527, %v541
  %v550 = vcombine.high %v527, %v541
  %v551 = vcombine.low %v534, %v548
  %v552 = vcombine.high %v534, %v548
  %v553 = vcombine.low %v55, %v56
  %v554 = vcombine.high %v55, %v56
  %v555 = vcombine.low %v57, %v58
  %v556 = vcombine.high %v57, %v58
  %v558 = vunpack.c.l.s4 1983009808
  %v559 = vunpack.c.0.s8 %v558
  %v560 = vlaneseq
  %v561 = vshrl.u32 %v560, 7
  %v562 = vsub.s32 %v559, %v561
  %v563 = vrot.slane %v553, %v562
  %v565 = vunpack.c.l.s4 1983009808
  %v566 = vunpack.c.0.s8 %v565
  %v567 = vlaneseq
  %v568 = vshrl.u32 %v567, 7
  %v569 = vsub.s32 %v566, %v568
  %v570 = vrot.slane %v554, %v569
  %v572 = vunpack.c.l.s4 1983009808
  %v573 = vunpack.c.0.s8 %v572
  %v574 = vlaneseq
  %v575 = vshrl.u32 %v574, 7
  %v576 = vsub.s32 %v573, %v575
  %v577 = vrot.slane %v555, %v576
  %v579 = vunpack.c.l.s4 1983009808
  %v580 = vunpack.c.0.s8 %v579
  %v581 = vlaneseq
  %v582 = vshrl.u32 %v581, 7
  %v583 = vsub.s32 %v580, %v582
  %v584 = vrot.slane %v556, %v583
  %v585 = vcombine.low %v563, %v577
  %v586 = vcombine.high %v563, %v577
  %v587 = vcombine.low %v570, %v584
  %v588 = vcombine.high %v570, %v584
  %v589 = vcombine.low %v59, %v60
  %v590 = vcombine.high %v59, %v60
  %v591 = vcombine.low %v61, %v62
  %v592 = vcombine.high %v61, %v62
  %v594 = vunpack.c.l.s4 1983009808
  %v595 = vunpack.c.0.s8 %v594
  %v596 = vlaneseq
  %v597 = vshrl.u32 %v596, 7
  %v598 = vsub.s32 %v595, %v597
  %v599 = vrot.slane %v589, %v598
  %v601 = vunpack.c.l.s4 1983009808
  %v602 = vunpack.c.0.s8 %v601
  %v603 = vlaneseq
  %v604 = vshrl.u32 %v603, 7
  %v605 = vsub.s32 %v602, %v604
  %v606 = vrot.slane %v590, %v605
  %v608 = vunpack.c.l.s4 1983009808
  %v609 = vunpack.c.0.s8 %v608
  %v610 = vlaneseq
  %v611 = vshrl.u32 %v610, 7
  %v612 = vsub.s32 %v609, %v611
  %v613 = vrot.slane %v591, %v612
  %v615 = vunpack.c.l.s4 1983009808
  %v616 = vunpack.c.0.s8 %v615
  %v617 = vlaneseq
  %v618 = vshrl.u32 %v617, 7
  %v619 = vsub.s32 %v616, %v618
  %v620 = vrot.slane %v592, %v619
  %v621 = vcombine.low %v599, %v613
  %v622 = vcombine.high %v599, %v613
  %v623 = vcombine.low %v606, %v620
  %v624 = vcombine.high %v606, %v620
  %v625 = vcombine.low %v63, %v64
  %v626 = vcombine.high %v63, %v64
  %v627 = vcombine.low %v65, %v66
  %v628 = vcombine.high %v65, %v66
  %v630 = vunpack.c.l.s4 1983009808
  %v631 = vunpack.c.0.s8 %v630
  %v632 = vlaneseq
  %v633 = vshrl.u32 %v632, 7
  %v634 = vsub.s32 %v631, %v633
  %v635 = vrot.slane %v625, %v634
  %v637 = vunpack.c.l.s4 1983009808
  %v638 = vunpack.c.0.s8 %v637
  %v639 = vlaneseq
  %v640 = vshrl.u32 %v639, 7
  %v641 = vsub.s32 %v638, %v640
  %v642 = vrot.slane %v626, %v641
  %v644 = vunpack.c.l.s4 1983009808
  %v645 = vunpack.c.0.s8 %v644
  %v646 = vlaneseq
  %v647 = vshrl.u32 %v646, 7
  %v648 = vsub.s32 %v645, %v647
  %v649 = vrot.slane %v627, %v648
  %v651 = vunpack.c.l.s4 1983009808
  %v652 = vunpack.c.0.s8 %v651
  %v653 = vlaneseq
  %v654 = vshrl.u32 %v653, 7
  %v655 = vsub.s32 %v652, %v654
  %v656 = vrot.slane %v628, %v655
  %v657 = vcombine.low %v635, %v649
  %v658 = vcombine.high %v635, %v649
  %v659 = vcombine.low %v642, %v656
  %v660 = vcombine.high %v642, %v656
  %v661 = vcombine.low %v67, %v68
  %v662 = vcombine.high %v67, %v68
  %v663 = vcombine.low %v69, %v70
  %v664 = vcombine.high %v69, %v70
  %v666 = vunpack.c.l.s4 1983009808
  %v667 = vunpack.c.0.s8 %v666
  %v668 = vlaneseq
  %v669 = vshrl.u32 %v668, 7
  %v670 = vsub.s32 %v667, %v669
  %v671 = vrot.slane %v661, %v670
  %v673 = vunpack.c.l.s4 1983009808
  %v674 = vunpack.c.0.s8 %v673
  %v675 = vlaneseq
  %v676 = vshrl.u32 %v675, 7
  %v677 = vsub.s32 %v674, %v676
  %v678 = vrot.slane %v662, %v677
  %v680 = vunpack.c.l.s4 1983009808
  %v681 = vunpack.c.0.s8 %v680
  %v682 = vlaneseq
  %v683 = vshrl.u32 %v682, 7
  %v684 = vsub.s32 %v681, %v683
  %v685 = vrot.slane %v663, %v684
  %v687 = vunpack.c.l.s4 1983009808
  %v688 = vunpack.c.0.s8 %v687
  %v689 = vlaneseq
  %v690 = vshrl.u32 %v689, 7
  %v691 = vsub.s32 %v688, %v690
  %v692 = vrot.slane %v664, %v691
  %v693 = vcombine.low %v671, %v685
  %v694 = vcombine.high %v671, %v685
  %v695 = vcombine.low %v678, %v692
  %v696 = vcombine.high %v678, %v692
  %v697 = vcombine.low %v71, %v72
  %v698 = vcombine.high %v71, %v72
  %v699 = vcombine.low %v73, %v74
  %v700 = vcombine.high %v73, %v74
  %v702 = vunpack.c.l.s4 1983009808
  %v703 = vunpack.c.0.s8 %v702
  %v704 = vlaneseq
  %v705 = vshrl.u32 %v704, 7
  %v706 = vsub.s32 %v703, %v705
  %v707 = vrot.slane %v697, %v706
  %v709 = vunpack.c.l.s4 1983009808
  %v710 = vunpack.c.0.s8 %v709
  %v711 = vlaneseq
  %v712 = vshrl.u32 %v711, 7
  %v713 = vsub.s32 %v710, %v712
  %v714 = vrot.slane %v698, %v713
  %v716 = vunpack.c.l.s4 1983009808
  %v717 = vunpack.c.0.s8 %v716
  %v718 = vlaneseq
  %v719 = vshrl.u32 %v718, 7
  %v720 = vsub.s32 %v717, %v719
  %v721 = vrot.slane %v699, %v720
  %v723 = vunpack.c.l.s4 1983009808
  %v724 = vunpack.c.0.s8 %v723
  %v725 = vlaneseq
  %v726 = vshrl.u32 %v725, 7
  %v727 = vsub.s32 %v724, %v726
  %v728 = vrot.slane %v700, %v727
  %v729 = vcombine.low %v707, %v721
  %v730 = vcombine.high %v707, %v721
  %v731 = vcombine.low %v714, %v728
  %v732 = vcombine.high %v714, %v728
  %v733 = vcombine.low %v75, %v76
  %v734 = vcombine.high %v75, %v76
  %v735 = vcombine.low %v77, %v78
  %v736 = vcombine.high %v77, %v78
  %v738 = vunpack.c.l.s4 1983009808
  %v739 = vunpack.c.0.s8 %v738
  %v740 = vlaneseq
  %v741 = vshrl.u32 %v740, 7
  %v742 = vsub.s32 %v739, %v741
  %v743 = vrot.slane %v733, %v742
  %v745 = vunpack.c.l.s4 1983009808
  %v746 = vunpack.c.0.s8 %v745
  %v747 = vlaneseq
  %v748 = vshrl.u32 %v747, 7
  %v749 = vsub.s32 %v746, %v748
  %v750 = vrot.slane %v734, %v749
  %v752 = vunpack.c.l.s4 1983009808
  %v753 = vunpack.c.0.s8 %v752
  %v754 = vlaneseq
  %v755 = vshrl.u32 %v754, 7
  %v756 = vsub.s32 %v753, %v755
  %v757 = vrot.slane %v735, %v756
  %v759 = vunpack.c.l.s4 1983009808
  %v760 = vunpack.c.0.s8 %v759
  %v761 = vlaneseq
  %v762 = vshrl.u32 %v761, 7
  %v763 = vsub.s32 %v760, %v762
  %v764 = vrot.slane %v736, %v763
  %v765 = vcombine.low %v743, %v757
  %v766 = vcombine.high %v743, %v757
  %v767 = vcombine.low %v750, %v764
  %v768 = vcombine.high %v750, %v764
  %vm817 = vcmask 130048
  %v818 = vsel %vm817, %v228, 0
  %v820 = vsel %vm817, %v264, 0
  %v822 = vsel %vm817, %v300, 0
  %v824 = vsel %vm817, %v336, 0
  %v826 = vsel %vm817, %v372, 0
  %v828 = vsel %vm817, %v408, 0
  %v830 = vsel %vm817, %v444, 0
  %v832 = vsel %vm817, %v480, 0
  %v834 = vsel %vm817, %v516, 0
  %v836 = vsel %vm817, %v552, 0
  %v838 = vsel %vm817, %v588, 0
  %v840 = vsel %vm817, %v624, 0
  %v842 = vsel %vm817, %v660, 0
  %v844 = vsel %vm817, %v696, 0
  %v846 = vsel %vm817, %v732, 0
  %v848 = vsel %vm817, %v768, 0
  %850 = vmatprep.subr.mxu0 0.0
  %851 = vmatpush1.msra.mxu0 %v79
  %852 = vmatprep.subr.mxu0 0.0
  %853 = vmatpush1.msra.mxu0 %v80
  %854 = vmatprep.subr.mxu0 0.0
  %855 = vmatpush1.msra.mxu0 %v81
  %856 = vmatprep.subr.mxu0 0.0
  %857 = vmatpush1.msra.mxu0 %v82
  %858 = vmatprep.subr.mxu0 0.0
  %859 = vmatpush1.msra.mxu0 %v83
  %860 = vmatprep.subr.mxu0 0.0
  %861 = vmatpush1.msra.mxu0 %v84
  %862 = vmatprep.subr.mxu0 0.0
  %863 = vmatpush1.msra.mxu0 %v85
  %864 = vmatprep.subr.mxu0 0.0
  %865 = vmatpush1.msra.mxu0 %v86
  %866 = vmatprep.subr.mxu0 0.0
  %867 = vmatpush1.msra.mxu0 %v87
  %868 = vmatprep.subr.mxu0 0.0
  %869 = vmatpush1.msra.mxu0 %v88
  %870 = vmatprep.subr.mxu0 0.0
  %871 = vmatpush1.msra.mxu0 %v89
  %872 = vmatprep.subr.mxu0 0.0
  %873 = vmatpush1.msra.mxu0 %v90
  %874 = vmatprep.subr.mxu0 0.0
  %875 = vmatpush1.msra.mxu0 %v91
  %876 = vmatprep.subr.mxu0 0.0
  %877 = vmatpush1.msra.mxu0 %v92
  %878 = vmatprep.subr.mxu0 0.0
  %879 = vmatpush1.msra.mxu0 %v93
  %880 = vmatprep.subr.mxu0 0.0
  %881 = vmatpush1.msra.mxu0 %v94
  %882 = vmatprep.subr.mxu0 0.0
  %883 = vmatpush1.msra.mxu0 %v95
  %884 = vmatprep.subr.mxu0 0.0
  %885 = vmatpush1.msra.mxu0 %v96
  %886 = vmatprep.subr.mxu0 0.0
  %887 = vmatpush1.msra.mxu0 %v97
  %888 = vmatprep.subr.mxu0 0.0
  %889 = vmatpush1.msra.mxu0 %v98
  %890 = vmatprep.subr.mxu0 0.0
  %891 = vmatpush1.msra.mxu0 %v99
  %892 = vmatprep.subr.mxu0 0.0
  %893 = vmatpush1.msra.mxu0 %v100
  %894 = vmatprep.subr.mxu0 0.0
  %895 = vmatpush1.msra.mxu0 %v101
  %896 = vmatprep.subr.mxu0 0.0
  %897 = vmatpush1.msra.mxu0 %v102
  %898 = vmatprep.subr.mxu0 0.0
  %899 = vmatpush1.msra.mxu0 %v103
  %900 = vmatprep.subr.mxu0 0.0
  %901 = vmatpush1.msra.mxu0 %v104
  %902 = vmatprep.subr.mxu0 0.0
  %903 = vmatpush1.msra.mxu0 %v105
  %904 = vmatprep.subr.mxu0 0.0
  %905 = vmatpush1.msra.mxu0 %v106
  %906 = vmatprep.subr.mxu0 0.0
  %907 = vmatpush1.msra.mxu0 %v107
  %908 = vmatprep.subr.mxu0 0.0
  %909 = vmatpush1.msra.mxu0 %v108
  %910 = vmatprep.subr.mxu0 0.0
  %911 = vmatpush1.msra.mxu0 %v109
  %912 = vmatprep.subr.mxu0 0.0
  %913 = vmatpush1.msra.mxu0 %v110
  %914 = vmatprep.mubr.f32.mxu0 %v226
  %915 = vmatmul.mubr.f32.gmra.mrb[0].mxu0 %v225
  %v916 = vpop.f32.mrb[0].mxu0
  %v917 = vadd.f32 0.0, %v916
  %v918 = vpop.f32.mrb[0].mxu0
  %919 = vmatprep.mubr.f32.mxu0 %v262
  %920 = vmatmul.mubr.f32.gmra.mrb[0].mxu0 %v261
  %v921 = vpop.f32.mrb[0].mxu0
  %v922 = vadd.f32 0.0, %v921
  %v923 = vpop.f32.mrb[0].mxu0
  %924 = vmatprep.mubr.f32.mxu0 %v298
  %925 = vmatmul.mubr.f32.gmra.mrb[0].mxu0 %v297
  %v926 = vpop.f32.mrb[0].mxu0
  %v927 = vadd.f32 0.0, %v926
  %v928 = vpop.f32.mrb[0].mxu0
  %929 = vmatprep.mubr.f32.mxu0 %v334
  %930 = vmatmul.mubr.f32.gmra.mrb[0].mxu0 %v333
  %v931 = vpop.f32.mrb[0].mxu0
  %v932 = vadd.f32 0.0, %v931
  %v933 = vpop.f32.mrb[0].mxu0
  %934 = vmatprep.mubr.f32.mxu0 %v370
  %935 = vmatmul.mubr.f32.gmra.mrb[0].mxu0 %v369
  %v936 = vpop.f32.mrb[0].mxu0
  %v937 = vadd.f32 0.0, %v936
  %v938 = vpop.f32.mrb[0].mxu0
  %939 = vmatprep.mubr.f32.mxu0 %v406
  %940 = vmatmul.mubr.f32.gmra.mrb[0].mxu0 %v405
  %v941 = vpop.f32.mrb[0].mxu0
  %v942 = vadd.f32 0.0, %v941
  %v943 = vpop.f32.mrb[0].mxu0
  %944 = vmatprep.mubr.f32.mxu0 %v442
  %945 = vmatmul.mubr.f32.gmra.mrb[0].mxu0 %v441
  %v946 = vpop.f32.mrb[0].mxu0
  %v947 = vadd.f32 0.0, %v946
  %v948 = vpop.f32.mrb[0].mxu0
  %949 = vmatprep.mubr.f32.mxu0 %v478
  %950 = vmatmul.mubr.f32.gmra.mrb[0].mxu0 %v477
  %v951 = vpop.f32.mrb[0].mxu0
  %v952 = vadd.f32 0.0, %v951
  %v953 = vpop.f32.mrb[0].mxu0
  %954 = vmatprep.mubr.f32.mxu0 %v514
  %955 = vmatmul.mubr.f32.gmra.mrb[0].mxu0 %v513
  %v956 = vpop.f32.mrb[0].mxu0
  %v957 = vadd.f32 0.0, %v956
  %v958 = vpop.f32.mrb[0].mxu0
  %959 = vmatprep.mubr.f32.mxu0 %v550
  %960 = vmatmul.mubr.f32.gmra.mrb[0].mxu0 %v549
  %v961 = vpop.f32.mrb[0].mxu0
  %v962 = vadd.f32 0.0, %v961
  %v963 = vpop.f32.mrb[0].mxu0
  %964 = vmatprep.mubr.f32.mxu0 %v586
  %965 = vmatmul.mubr.f32.gmra.mrb[0].mxu0 %v585
  %v966 = vpop.f32.mrb[0].mxu0
  %v967 = vadd.f32 0.0, %v966
  %v968 = vpop.f32.mrb[0].mxu0
  %969 = vmatprep.mubr.f32.mxu0 %v622
  %970 = vmatmul.mubr.f32.gmra.mrb[0].mxu0 %v621
  %v971 = vpop.f32.mrb[0].mxu0
  %v972 = vadd.f32 0.0, %v971
  %v973 = vpop.f32.mrb[0].mxu0
  %974 = vmatprep.mubr.f32.mxu0 %v658
  %975 = vmatmul.mubr.f32.gmra.mrb[0].mxu0 %v657
  %v976 = vpop.f32.mrb[0].mxu0
  %v977 = vadd.f32 0.0, %v976
  %v978 = vpop.f32.mrb[0].mxu0
  %979 = vmatprep.mubr.f32.mxu0 %v694
  %980 = vmatmul.mubr.f32.gmra.mrb[0].mxu0 %v693
  %v981 = vpop.f32.mrb[0].mxu0
  %v982 = vadd.f32 0.0, %v981
  %v983 = vpop.f32.mrb[0].mxu0
  %984 = vmatprep.mubr.f32.mxu0 %v730
  %985 = vmatmul.mubr.f32.gmra.mrb[0].mxu0 %v729
  %v986 = vpop.f32.mrb[0].mxu0
  %v987 = vadd.f32 0.0, %v986
  %v988 = vpop.f32.mrb[0].mxu0
  %989 = vmatprep.mubr.f32.mxu0 %v766
  %990 = vmatmul.mubr.f32.gmra.mrb[0].mxu0 %v765
  %v991 = vpop.f32.mrb[0].mxu0
  %v992 = vadd.f32 0.0, %v991
  %v993 = vpop.f32.mrb[0].mxu0
  %994 = vdwg.mxu0
  %995 = vmatprep.subr.mxu0 0.0
  %996 = vmatpush1.msra.mxu0 %v111
  %997 = vmatprep.subr.mxu0 0.0
  %998 = vmatpush1.msra.mxu0 %v112
  %999 = vmatprep.subr.mxu0 0.0
  %1000 = vmatpush1.msra.mxu0 %v113
  %1001 = vmatprep.subr.mxu0 0.0
  %1002 = vmatpush1.msra.mxu0 %v114
  %1003 = vmatprep.subr.mxu0 0.0
  %1004 = vmatpush1.msra.mxu0 %v115
  %1005 = vmatprep.subr.mxu0 0.0
  %1006 = vmatpush1.msra.mxu0 %v116
  %1007 = vmatprep.subr.mxu0 0.0
  %1008 = vmatpush1.msra.mxu0 %v117
  %1009 = vmatprep.subr.mxu0 0.0
  %1010 = vmatpush1.msra.mxu0 %v118
  %1011 = vmatprep.subr.mxu0 0.0
  %1012 = vmatpush1.msra.mxu0 %v119
  %1013 = vmatprep.subr.mxu0 0.0
  %1014 = vmatpush1.msra.mxu0 %v120
  %1015 = vmatprep.subr.mxu0 0.0
  %1016 = vmatpush1.msra.mxu0 %v121
  %1017 = vmatprep.subr.mxu0 0.0
  %1018 = vmatpush1.msra.mxu0 %v122
  %1019 = vmatprep.subr.mxu0 0.0
  %1020 = vmatpush1.msra.mxu0 %v123
  %1021 = vmatprep.subr.mxu0 0.0
  %1022 = vmatpush1.msra.mxu0 %v124
  %1023 = vmatprep.subr.mxu0 0.0
  %1024 = vmatpush1.msra.mxu0 %v125
  %1025 = vmatprep.subr.mxu0 0.0
  %1026 = vmatpush1.msra.mxu0 %v126
  %1027 = vmatprep.subr.mxu0 0.0
  %1028 = vmatpush1.msra.mxu0 %v127
  %1029 = vmatprep.subr.mxu0 0.0
  %1030 = vmatpush1.msra.mxu0 %v128
  %1031 = vmatprep.subr.mxu0 0.0
  %1032 = vmatpush1.msra.mxu0 0.0
  %1033 = vmatprep.subr.mxu0 0.0
  %1034 = vmatpush1.msra.mxu0 0.0
  %1035 = vmatprep.subr.mxu0 0.0
  %1036 = vmatpush1.msra.mxu0 0.0
  %1037 = vmatprep.subr.mxu0 0.0
  %1038 = vmatpush1.msra.mxu0 0.0
  %1039 = vmatprep.subr.mxu0 0.0
  %1040 = vmatpush1.msra.mxu0 0.0
  %1041 = vmatprep.subr.mxu0 0.0
  %1042 = vmatpush1.msra.mxu0 0.0
  %1043 = vmatprep.subr.mxu0 0.0
  %1044 = vmatpush1.msra.mxu0 0.0
  %1045 = vmatprep.subr.mxu0 0.0
  %1046 = vmatpush1.msra.mxu0 0.0
  %1047 = vmatprep.subr.mxu0 0.0
  %1048 = vmatpush1.msra.mxu0 0.0
  %1049 = vmatprep.subr.mxu0 0.0
  %1050 = vmatpush1.msra.mxu0 0.0
  %1051 = vmatprep.subr.mxu0 0.0
  %1052 = vmatpush1.msra.mxu0 0.0
  %1053 = vmatprep.subr.mxu0 0.0
  %1054 = vmatpush1.msra.mxu0 0.0
  %1055 = vmatprep.subr.mxu0 0.0
  %1056 = vmatpush1.msra.mxu0 0.0
  %1057 = vmatprep.subr.mxu0 0.0
  %1058 = vmatpush1.msra.mxu0 0.0
  %1059 = vmatprep.mubr.f32.mxu0 %v818
  %1060 = vmatmul.mubr.f32.gmra.mrb[0].mxu0 %v227
  %v1061 = vpop.f32.mrb[0].mxu0
  %v1062 = vadd.f32 %v917, %v1061
  %v1063 = vpop.f32.mrb[0].mxu0
  %1064 = vmatprep.mubr.f32.mxu0 %v820
  %1065 = vmatmul.mubr.f32.gmra.mrb[0].mxu0 %v263
  %v1066 = vpop.f32.mrb[0].mxu0
  %v1067 = vadd.f32 %v922, %v1066
  %v1068 = vpop.f32.mrb[0].mxu0
  %1069 = vmatprep.mubr.f32.mxu0 %v822
  %1070 = vmatmul.mubr.f32.gmra.mrb[0].mxu0 %v299
  %v1071 = vpop.f32.mrb[0].mxu0
  %v1072 = vadd.f32 %v927, %v1071
  %v1073 = vpop.f32.mrb[0].mxu0
  %1074 = vmatprep.mubr.f32.mxu0 %v824
  %1075 = vmatmul.mubr.f32.gmra.mrb[0].mxu0 %v335
  %v1076 = vpop.f32.mrb[0].mxu0
  %v1077 = vadd.f32 %v932, %v1076
  %v1078 = vpop.f32.mrb[0].mxu0
  %1079 = vmatprep.mubr.f32.mxu0 %v826
  %1080 = vmatmul.mubr.f32.gmra.mrb[0].mxu0 %v371
  %v1081 = vpop.f32.mrb[0].mxu0
  %v1082 = vadd.f32 %v937, %v1081
  %v1083 = vpop.f32.mrb[0].mxu0
  %1084 = vmatprep.mubr.f32.mxu0 %v828
  %1085 = vmatmul.mubr.f32.gmra.mrb[0].mxu0 %v407
  %v1086 = vpop.f32.mrb[0].mxu0
  %v1087 = vadd.f32 %v942, %v1086
  %v1088 = vpop.f32.mrb[0].mxu0
  %1089 = vmatprep.mubr.f32.mxu0 %v830
  %1090 = vmatmul.mubr.f32.gmra.mrb[0].mxu0 %v443
  %v1091 = vpop.f32.mrb[0].mxu0
  %v1092 = vadd.f32 %v947, %v1091
  %v1093 = vpop.f32.mrb[0].mxu0
  %1094 = vmatprep.mubr.f32.mxu0 %v832
  %1095 = vmatmul.mubr.f32.gmra.mrb[0].mxu0 %v479
  %v1096 = vpop.f32.mrb[0].mxu0
  %v1097 = vadd.f32 %v952, %v1096
  %v1098 = vpop.f32.mrb[0].mxu0
  %1099 = vmatprep.mubr.f32.mxu0 %v834
  %1100 = vmatmul.mubr.f32.gmra.mrb[0].mxu0 %v515
  %v1101 = vpop.f32.mrb[0].mxu0
  %v1102 = vadd.f32 %v957, %v1101
  %v1103 = vpop.f32.mrb[0].mxu0
  %1104 = vmatprep.mubr.f32.mxu0 %v836
  %1105 = vmatmul.mubr.f32.gmra.mrb[0].mxu0 %v551
  %v1106 = vpop.f32.mrb[0].mxu0
  %v1107 = vadd.f32 %v962, %v1106
  %v1108 = vpop.f32.mrb[0].mxu0
  %1109 = vmatprep.mubr.f32.mxu0 %v838
  %1110 = vmatmul.mubr.f32.gmra.mrb[0].mxu0 %v587
  %v1111 = vpop.f32.mrb[0].mxu0
  %v1112 = vadd.f32 %v967, %v1111
  %v1113 = vpop.f32.mrb[0].mxu0
  %1114 = vmatprep.mubr.f32.mxu0 %v840
  %1115 = vmatmul.mubr.f32.gmra.mrb[0].mxu0 %v623
  %v1116 = vpop.f32.mrb[0].mxu0
  %v1117 = vadd.f32 %v972, %v1116
  %v1118 = vpop.f32.mrb[0].mxu0
  %1119 = vmatprep.mubr.f32.mxu0 %v842
  %1120 = vmatmul.mubr.f32.gmra.mrb[0].mxu0 %v659
  %v1121 = vpop.f32.mrb[0].mxu0
  %v1122 = vadd.f32 %v977, %v1121
  %v1123 = vpop.f32.mrb[0].mxu0
  %1124 = vmatprep.mubr.f32.mxu0 %v844
  %1125 = vmatmul.mubr.f32.gmra.mrb[0].mxu0 %v695
  %v1126 = vpop.f32.mrb[0].mxu0
  %v1127 = vadd.f32 %v982, %v1126
  %v1128 = vpop.f32.mrb[0].mxu0
  %1129 = vmatprep.mubr.f32.mxu0 %v846
  %1130 = vmatmul.mubr.f32.gmra.mrb[0].mxu0 %v731
  %v1131 = vpop.f32.mrb[0].mxu0
  %v1132 = vadd.f32 %v987, %v1131
  %v1133 = vpop.f32.mrb[0].mxu0
  %1134 = vmatprep.mubr.f32.mxu0 %v848
  %1135 = vmatmul.mubr.f32.gmra.mrb[0].mxu0 %v767
  %v1136 = vpop.f32.mrb[0].mxu0
  %v1137 = vadd.f32 %v992, %v1136
  %v1138 = vpop.f32.mrb[0].mxu0
  %1139 = vdwg.mxu0
  %1140 = vxpose.xlu0.b32.start [1/16] %v1062, 128
  %1141 = vxpose.xlu0.b32.cont [2/16] %v1067, 128
  %1142 = vxpose.xlu0.b32.cont [3/16] %v1072, 128
  %1143 = vxpose.xlu0.b32.cont [4/16] %v1077, 128
  %1144 = vxpose.xlu0.b32.cont [5/16] %v1082, 128
  %1145 = vxpose.xlu0.b32.cont [6/16] %v1087, 128
  %1146 = vxpose.xlu0.b32.cont [7/16] %v1092, 128
  %1147 = vxpose.xlu0.b32.cont [8/16] %v1097, 128
  %1148 = vxpose.xlu0.b32.cont [9/16] %v1102, 128
  %1149 = vxpose.xlu0.b32.cont [10/16] %v1107, 128
  %1150 = vxpose.xlu0.b32.cont [11/16] %v1112, 128
  %1151 = vxpose.xlu0.b32.cont [12/16] %v1117, 128
  %1152 = vxpose.xlu0.b32.cont [13/16] %v1122, 128
  %1153 = vxpose.xlu0.b32.cont [14/16] %v1127, 128
  %1154 = vxpose.xlu0.b32.cont [15/16] %v1132, 128
  %1155 = vxpose.xlu0.b32.end [16/16] %v1137, 128
  %v1156 = vpop.trf.xlu0
  %v1157 = vpop.trf.xlu0
  %v1158 = vpop.trf.xlu0
  %v1159 = vpop.trf.xlu0
  %v1160 = vpop.trf.xlu0
  %v1161 = vpop.trf.xlu0
  %v1162 = vpop.trf.xlu0
  %v1163 = vpop.trf.xlu0
  %v1164 = vpop.trf.xlu0
  %v1165 = vpop.trf.xlu0
  %v1166 = vpop.trf.xlu0
  %v1167 = vpop.trf.xlu0
  %v1168 = vpop.trf.xlu0
  %v1169 = vpop.trf.xlu0
  %v1170 = vpop.trf.xlu0
  %v1171 = vpop.trf.xlu0
  %s1172 = sld [smem:[#allocation2]]
  %v1173 = vstv %s1172
  %v1174 = vadd.f32 %v1156, %v1173
  %v1175 = vxor.u32 %v1174, 2147483648
  %v1176 = vmul.f32 %v1175, 1.442695
  %v1177 = vpow.pop %v1176
  %v1178 = vadd.f32 %v1177, 1.0
  %v1179 = vrcp.pop %v1178
  %v1180 = vmul.f32 1.0, %v1179
  %1181 = vst [vmem:[%s3] sm:$0x1] %v1180
  // Predicated region
  $region14: #{discriminator_forward.1} parent=0 // pred_check
    _
  $region15: #{discriminator_forward.1} parent=0 // pred_check_branch
    %1183 = sbr.rel (0) target = $region17
  $region16: #{discriminator_forward.1} parent=0 // pred_region
    _
  $region17: #{discriminator_forward.1} parent=0 // pred_fallthru
    _
  // Predicated region
  $region18: #{discriminator_forward.1} parent=0 // pred_check
    _
  $region19: #{discriminator_forward.1} parent=0 // pred_check_branch
    %1185 = sbr.rel (0) target = $region21
  $region20: #{discriminator_forward.1} parent=0 // pred_region
    _
  $region21: #{discriminator_forward.1} parent=0 // pred_fallthru
    _

</llo_original>
